<compile_context>
chip_gen: v6e
topology: v6e:2x2x1
jax: 0.10.0
libtpu: 0.0.40
codegen_flags: <defaults>
</compile_context>

<pallas_src>
import jax
import jax.numpy as jnp
from jax.experimental import pallas as pl
from jax.experimental.pallas import tpu as pltpu

HIDDEN1 = 56
HIDDEN2 = 188


def _round_up(x, m):
    return (x + m - 1) // m * m


# ----------------------------------------------------------------------------
# Kernel: whole MLP on one batch tile.  Biases are already folded into the
# weights; the bias-slot column of each activation is exactly 1.0 by
# construction, so no bias adds are needed in-kernel.
# ----------------------------------------------------------------------------
def mlp_kernel(x_ref, w1_ref, w2_ref, w3_ref, o_ref):
    h1 = jnp.maximum(
        jnp.dot(x_ref[...], w1_ref[...], preferred_element_type=jnp.float32), 0.0
    )
    h2 = jnp.maximum(
        jnp.dot(h1.astype(w2_ref.dtype), w2_ref[...],
                preferred_element_type=jnp.float32), 0.0
    )
    out = jnp.dot(h2.astype(w3_ref.dtype), w3_ref[...],
                  preferred_element_type=jnp.float32)
    o_ref[...] = out.astype(o_ref.dtype)           # bf16 lane-dense writeback


# ----------------------------------------------------------------------------
# Host-side parameter packing: fold bias into weight, pad dims, cast to bf16.
#   W1a: [D0A, H1P]   rows[:32]=W1, row 32=b1, W1a[32, 56]=1.0 (propagate ones)
#   W2a: [H1P, H2P]   rows[:56]=W2, row 56=b2, W2a[56, 188]=1.0
#   W3a: [H2P, OUTP]  rows[:188]=W3, row 188=b3  (output lane-dense, 128 pad)
# ----------------------------------------------------------------------------
def pack_params(params, input_size, num_classes, dtype=jnp.bfloat16):
    w1, b1 = params["fc1"]
    w2, b2 = params["fc2"]
    w3, b3 = params["fc3"]

    d0a = _round_up(input_size + 1, 8)          # 32 -> 40  (bias slot at col 32)
    h1p = _round_up(HIDDEN1 + 1, 8)             # 56 -> 64  (bias slot at col 56)
    h2p = _round_up(HIDDEN2 + 1, 8)             # 188 -> 192 (bias slot at col 188)
    outp = _round_up(max(num_classes, 1), 128)  # 10 -> 128 (lane-dense output)

    w1a = jnp.zeros((d0a, h1p), jnp.float32)
    w1a = w1a.at[:input_size, :HIDDEN1].set(w1)
    w1a = w1a.at[input_size, :HIDDEN1].set(b1.reshape(-1))
    w1a = w1a.at[input_size, HIDDEN1].set(1.0)      # keep the ones column alive

    w2a = jnp.zeros((h1p, h2p), jnp.float32)
    w2a = w2a.at[:HIDDEN1, :HIDDEN2].set(w2)
    w2a = w2a.at[HIDDEN1, :HIDDEN2].set(b2.reshape(-1))
    w2a = w2a.at[HIDDEN1, HIDDEN2].set(1.0)

    w3a = jnp.zeros((h2p, outp), jnp.float32)
    w3a = w3a.at[:HIDDEN2, :num_classes].set(w3)
    w3a = w3a.at[HIDDEN2, :num_classes].set(b3.reshape(-1))

    return w1a.astype(dtype), w2a.astype(dtype), w3a.astype(dtype)


def _augment_x(x, input_size, d0a, b_pad, dtype=jnp.bfloat16):
    """Pad features input_size->d0a with a 1.0 bias-slot column and zero-pad
    the batch to b_pad rows (padded rows are sliced away afterwards)."""
    b = x.shape[0]
    xa = jnp.zeros((b_pad, d0a), jnp.float32)
    xa = xa.at[:b, :input_size].set(x)
    xa = xa.at[:b, input_size].set(1.0)
    return xa.astype(dtype)


# ----------------------------------------------------------------------------
# Wrapper: adaptively batch-tiled pallas_call with resident weights.
# ----------------------------------------------------------------------------
def neural_network_forward(x, packed, *, num_classes, block_b=2048, min_tiles=2):
    w1a, w2a, w3a = packed
    d0a = w1a.shape[0]
    outp = w3a.shape[1]
    b = x.shape[0]
    input_size = x.shape[1]

    # v5e scoped-VMEM safety: cap the tile so defaults always fit.
    block_b = min(max(block_b, 16), 4096)

    # Adaptive tiling: >=2 grid steps when possible (v7x megacore), tile a
    # multiple of 16 (bf16 sublane packing), padding waste < 16 rows per tile.
    b16 = _round_up(max(b, 1), 16)
    want_tiles = pl.cdiv(b16, block_b)
    if b16 >= 2 * 16:
        want_tiles = max(want_tiles, min_tiles)
    blk = min(block_b, _round_up(pl.cdiv(b16, want_tiles), 16))
    grid_n = pl.cdiv(b16, blk)
    b_pad = grid_n * blk

    xa = _augment_x(x, input_size, d0a, b_pad, dtype=w1a.dtype)

    flops = 2 * b_pad * (d0a * w1a.shape[1]
                         + w2a.shape[0] * w2a.shape[1]
                         + w3a.shape[0] * outp)
    bytes_accessed = (xa.size * xa.dtype.itemsize
                      + sum(int(w.size) * w.dtype.itemsize for w in packed)
                      + b_pad * outp * 2)                       # bf16 output

    # Deeper buffering on the streaming operands only when the grid is deep
    # enough to benefit; resident weights keep the default depth.
    if grid_n >= 3:
        x_spec = pl.BlockSpec((blk, d0a), lambda i: (i, 0),
                              pipeline_mode=pl.Buffered(3))
        out_spec = pl.BlockSpec((blk, outp), lambda i: (i, 0),
                                pipeline_mode=pl.Buffered(3))
    else:
        x_spec = pl.BlockSpec((blk, d0a), lambda i: (i, 0))
        out_spec = pl.BlockSpec((blk, outp), lambda i: (i, 0))

    out = pl.pallas_call(
        mlp_kernel,
        out_shape=jax.ShapeDtypeStruct((b_pad, outp), jnp.bfloat16),
        grid_spec=pltpu.PrefetchScalarGridSpec(
            num_scalar_prefetch=0,
            grid=(grid_n,),
            in_specs=[
                x_spec,                                            # x tile
                pl.BlockSpec(w1a.shape, lambda i: (0, 0)),         # resident
                pl.BlockSpec(w2a.shape, lambda i: (0, 0)),         # resident
                pl.BlockSpec(w3a.shape, lambda i: (0, 0)),         # resident
            ],
            out_specs=out_spec,
        ),
        compiler_params=pltpu.CompilerParams(
            dimension_semantics=("parallel",),                     # v7x 2-TC
        ),
        cost_estimate=pl.CostEstimate(
            flops=int(flops), transcendentals=0,
            bytes_accessed=int(bytes_accessed)),
    )(xa, w1a, w2a, w3a)

    return out[:b, :num_classes].astype(jnp.float32)


# ----------------------------------------------------------------------------
# Init + references
# ----------------------------------------------------------------------------
def init_params(key, input_size, num_classes):
    """nn.Linear-style init (uniform +/- 1/sqrt(fan_in)); weights stored
    pre-transposed as [in_features, out_features]."""
    dims = [(input_size, HIDDEN1), (HIDDEN1, HIDDEN2), (HIDDEN2, num_classes)]
    names = ["fc1", "fc2", "fc3"]
    params = {}
    for name, (fan_in, fan_out) in zip(names, dims):
        key, kw, kb = jax.random.split(key, 3)
        bound = 1.0 / jnp.sqrt(jnp.float32(fan_in))
        w = jax.random.uniform(kw, (fan_in, fan_out), jnp.float32, -bound, bound)
        b = jax.random.uniform(kb, (fan_out,), jnp.float32, -bound, bound)
        params[name] = (w, b)
    return params


def reference_forward_f32(x, params):
    w1, b1 = params["fc1"]
    w2, b2 = params["fc2"]
    w3, b3 = params["fc3"]
    h1 = jnp.maximum(x @ w1 + b1, 0.0)
    h2 = jnp.maximum(h1 @ w2 + b2, 0.0)
    return h2 @ w3 + b3


def reference_forward_matched(x, packed, input_size, num_classes):
    """Same bf16-operand / f32-accum / bf16-output math as the kernel (XLA)."""
    w1a, w2a, w3a = packed
    xa = _augment_x(x, input_size, w1a.shape[0], _round_up(x.shape[0], 16),
                    dtype=w1a.dtype)
    h1 = jnp.maximum(jnp.dot(xa, w1a, preferred_element_type=jnp.float32), 0.0)
    h2 = jnp.maximum(jnp.dot(h1.astype(w2a.dtype), w2a,
                             preferred_element_type=jnp.float32), 0.0)
    out = jnp.dot(h2.astype(w3a.dtype), w3a, preferred_element_type=jnp.float32)
    out = out.astype(jnp.bfloat16).astype(jnp.float32)   # match bf16 writeback
    return out[:x.shape[0], :num_classes]


if __name__ == "__main__":
    input_size = 32
    num_classes = 10
    batch = 200            # small, but exercises the adaptive 2-tile grid path

    key = jax.random.PRNGKey(0)
    key, kx = jax.random.split(key)
    x = jax.random.normal(kx, (batch, input_size), jnp.float32)
    params = init_params(key, input_size, num_classes)
    packed = pack_params(params, input_size, num_classes, dtype=jnp.bfloat16)

    out = neural_network_forward(x, packed, num_classes=num_classes)
    out = jax.block_until_ready(out)
    assert out.shape == (batch, num_classes)

    # Tight check vs. the same bf16/f32-accum/bf16-out math done in plain XLA.
    ref_matched = reference_forward_matched(x, packed, input_size, num_classes)
    assert jnp.allclose(out, ref_matched, atol=3e-2, rtol=3e-2), (
        "mismatch vs bf16-matched reference")

    # Looser check vs. the full-f32 PyTorch-equivalent module semantics
    # (differences: bf16 operand casts and bf16 output writeback).
    ref_f32 = reference_forward_f32(x, params)
    assert jnp.allclose(out, ref_f32, atol=1.5e-1, rtol=1.5e-1), (
        "mismatch vs f32 module reference")

    print("KERNEL_OK")
</pallas_src>

<mosaic_0001>
module attributes {stable_mosaic.version = 11 : i64} {
  func.func @mlp_kernel(%arg0: i32, %arg1: memref<112x40xbf16, #tpu.memory_space<vmem>>, %arg2: memref<40x64xbf16, #tpu.memory_space<vmem>>, %arg3: memref<64x192xbf16, #tpu.memory_space<vmem>>, %arg4: memref<192x128xbf16, #tpu.memory_space<vmem>>, %arg5: memref<112x128xbf16, #tpu.memory_space<vmem>>) attributes {dimension_semantics = [#tpu.dimension_semantics<parallel>], iteration_bounds = array<i64: 2>, scalar_prefetch = 0 : i64, scratch_operands = 0 : i64, tpu.core_type = #tpu.core_type<tc>, window_params = [{transform_indices = @transform_0, window_bounds = array<i64: 112, 40>}, {pipeline_mode = #tpu.pipeline_mode<synchronous>, transform_indices = @transform_1, window_bounds = array<i64: 40, 64>}, {pipeline_mode = #tpu.pipeline_mode<synchronous>, transform_indices = @transform_2, window_bounds = array<i64: 64, 192>}, {pipeline_mode = #tpu.pipeline_mode<synchronous>, transform_indices = @transform_3, window_bounds = array<i64: 192, 128>}, {transform_indices = @transform_4, window_bounds = array<i64: 112, 128>}]} {
    %c0 = arith.constant 0 : index
    %c0_0 = arith.constant 0 : index
    %0 = vector.load %arg1[%c0, %c0_0] : memref<112x40xbf16, #tpu.memory_space<vmem>>, vector<112x40xbf16>
    %c0_1 = arith.constant 0 : index
    %c0_2 = arith.constant 0 : index
    %1 = vector.load %arg2[%c0_1, %c0_2] : memref<40x64xbf16, #tpu.memory_space<vmem>>, vector<40x64xbf16>
    %cst = arith.constant dense<0.000000e+00> : vector<112x64xf32>
    %2 = tpu.matmul %0, %1, %cst {dimension_numbers = #tpu.dot_dimension_numbers<[1], [0], [0], [1], [0, 0, 1, 1], [], []>} : vector<112x40xbf16>, vector<40x64xbf16>, vector<112x64xf32> -> vector<112x64xf32>
    %cst_3 = arith.constant 0.000000e+00 : f32
    %3 = vector.broadcast %cst_3 : f32 to vector<112x64xf32>
    %4 = arith.maximumf %2, %3 : vector<112x64xf32>
    %5 = arith.truncf %4 : vector<112x64xf32> to vector<112x64xbf16>
    %c0_4 = arith.constant 0 : index
    %c0_5 = arith.constant 0 : index
    %6 = vector.load %arg3[%c0_4, %c0_5] : memref<64x192xbf16, #tpu.memory_space<vmem>>, vector<64x192xbf16>
    %cst_6 = arith.constant dense<0.000000e+00> : vector<112x192xf32>
    %7 = tpu.matmul %5, %6, %cst_6 {dimension_numbers = #tpu.dot_dimension_numbers<[1], [0], [0], [1], [0, 0, 1, 1], [], []>} : vector<112x64xbf16>, vector<64x192xbf16>, vector<112x192xf32> -> vector<112x192xf32>
    %cst_7 = arith.constant 0.000000e+00 : f32
    %8 = vector.broadcast %cst_7 : f32 to vector<112x192xf32>
    %9 = arith.maximumf %7, %8 : vector<112x192xf32>
    %10 = arith.truncf %9 : vector<112x192xf32> to vector<112x192xbf16>
    %c0_8 = arith.constant 0 : index
    %c0_9 = arith.constant 0 : index
    %11 = vector.load %arg4[%c0_8, %c0_9] : memref<192x128xbf16, #tpu.memory_space<vmem>>, vector<192x128xbf16>
    %cst_10 = arith.constant dense<0.000000e+00> : vector<112x128xf32>
    %12 = tpu.matmul %10, %11, %cst_10 {dimension_numbers = #tpu.dot_dimension_numbers<[1], [0], [0], [1], [0, 0, 1, 1], [], []>} : vector<112x192xbf16>, vector<192x128xbf16>, vector<112x128xf32> -> vector<112x128xf32>
    %13 = arith.truncf %12 : vector<112x128xf32> to vector<112x128xbf16>
    %c0_11 = arith.constant 0 : index
    %c0_12 = arith.constant 0 : index
    %14 = vector.load %arg5[%c0_11, %c0_12] : memref<112x128xbf16, #tpu.memory_space<vmem>>, vector<112x128xbf16>
    tpu.vector_store %arg5[%c0_11, %c0_12], %13 {strides = array<i32>} : memref<112x128xbf16, #tpu.memory_space<vmem>>, vector<112x128xbf16>,
    return
  }
  func.func @transform_0(%arg0: i32) -> (i32, i32) {
    %c0_i32 = arith.constant 0 : i32
    %c0_i32_0 = arith.constant 0 : i32
    return %arg0, %c0_i32 : i32, i32
  }
  func.func @transform_1(%arg0: i32) -> (i32, i32) {
    %c0_i32 = arith.constant 0 : i32
    %c0_i32_0 = arith.constant 0 : i32
    %c0_i32_1 = arith.constant 0 : i32
    return %c0_i32, %c0_i32_0 : i32, i32
  }
  func.func @transform_2(%arg0: i32) -> (i32, i32) {
    %c0_i32 = arith.constant 0 : i32
    %c0_i32_0 = arith.constant 0 : i32
    %c0_i32_1 = arith.constant 0 : i32
    return %c0_i32, %c0_i32_0 : i32, i32
  }
  func.func @transform_3(%arg0: i32) -> (i32, i32) {
    %c0_i32 = arith.constant 0 : i32
    %c0_i32_0 = arith.constant 0 : i32
    %c0_i32_1 = arith.constant 0 : i32
    return %c0_i32, %c0_i32_0 : i32, i32
  }
  func.func @transform_4(%arg0: i32) -> (i32, i32) {
    %c0_i32 = arith.constant 0 : i32
    %c0_i32_0 = arith.constant 0 : i32
    return %arg0, %c0_i32 : i32, i32
  }
}

</mosaic_0001>

<llo_original>
// kernel: tpu_custom_call.1
$region0: #{tpu_custom_call.1}
  #allocation0 [shape = 'u32[]', space=smem, size = 0x4, offset = 0x4, fixed_abs, tag = 'smem constant byte address 0x4 - core index']
  #allocation1 [shape = 'u32[144,128]{1,0:T(1,128)}', space=vmem, size = 0x12000, scoped, tag = 'internal scratch']
  %s0 = inlined_call_operand.vmem [shape: bf16[224,40], index: 0, kind: input, shape index: {}]
  %s1 = inlined_call_operand.vmem [shape: bf16[40,64], index: 1, kind: input, shape index: {}]
  %s2 = inlined_call_operand.hbm [shape: bf16[64,192], index: 2, kind: input, shape index: {}]
  %s3 = inlined_call_operand.vmem [shape: bf16[192,128], index: 3, kind: input, shape index: {}]
  %s4 = inlined_call_operand.hbm [shape: bf16[224,128], index: 4, kind: output, shape index: {}]
  %s5 = sld [smem:[#allocation0]]
  $region53: #{tpu_custom_call.1} parent=0
    _
  %s7 = ssub.s32 1, %s5
  %s8 = scalar_select 0, %s7, %s5
  $region1: #{tpu_custom_call.1} parent=0
    #allocation2 [shape = 'u8[32768]{0}', space=vmem, size = 0x8000, scoped, tag = 'input window, operand 2, single buffered']
    #allocation3 [shape = 's32[2]{0}', space=sflag, size = 0x8, scoped, tag = 'scoped memory for tpu_custom_call.1']
    #allocation4 [shape = 's32[2]{0}', space=sflag, size = 0x8, scoped, tag = 'scoped memory for tpu_custom_call.1']
    #allocation5 [shape = 'u8[57344]{0}', space=vmem, size = 0xe000, scoped, tag = 'output window, operand 0']
    %9 = vsyncpa [#allocation3], 0
    %10 = vsyncpa [#allocation4], 0
    %s11 = scalar_lea.sflag [#allocation4], 1
    %12 = vsyncpa %s11, 0
    loop: start=0, step=1, limit=4
    $region2: #{tpu_custom_call.1} parent=1 // loop_pre_header
      _
    $region3: #{tpu_custom_call.1} parent=1 // loop_header
      %s14 = sphi 0, %s18
      %p15 = scmp.ge.s32.totalorder %s14, 4
      %s24 = sphi 0, %s26
      %s27 = sphi 0, %s24
      %s28 = sphi 0, %s27
      %s44 = sphi 0, %s28
      %s48 = sphi 0, %s48
      %s50 = sphi 0, %s48
      %s51 = sphi 0, %s50
      %s65 = sphi 0, %s51
      %s69 = sphi 0, %s69
      %s71 = sphi 0, %s69
      %s72 = sphi 0, %s71
      %s86 = sphi 0, %s72
      %s90 = sphi 0, %s90
      %s92 = sphi 0, %s90
      %s93 = sphi 0, %s92
      %s107 = sphi 0, %s93
      %s113 = sphi 0, %s115
      %s116 = sphi 0, %s113
      %s117 = sphi 0, %s116
      %s133 = sphi 0, %s117
    $region4: #{tpu_custom_call.1} parent=1 // loop_header_branch
      %17 = sbr.rel (%p15) target = $region8
    $region5: #{tpu_custom_call.1} parent=1 // loop_body
      %s19 = ssub.s32 %s14, 1
      %s20 = ssub.s32 %s14, 2
      %s21 = sadd.s32 %s14, 1
      %s22 = ssub.s32 %s14, %s21
      %p23 = scmp.eq.s32.totalorder %s22, 0
      %s25 = sadd.s32 %s24, 1
      %s26 = scalar_select %p23, %s24, %s25
      %p29 = pneg %p23
      %p30 = scmp.eq.s32.totalorder %s14, 1
      %p31 = por %p29, %p30
      %p32 = scmp.ne.s32.totalorder %s24, %s27
      %p33 = scmp.eq.s32.totalorder %s14, 0
      %p34 = por %p32, %p33
      %p35 = scmp.ne.s32.totalorder %s24, %s27
      %p36 = scmp.eq.s32.totalorder %s19, 1
      %p37 = por %p35, %p36
      %p38 = scmp.ne.s32.totalorder %s27, %s28
      %p39 = scmp.eq.s32.totalorder %s19, 0
      %p40 = por %p38, %p39
      %p41 = scmp.ne.s32.totalorder %s27, %s28
      %p42 = scmp.eq.s32.totalorder %s20, 1
      %p43 = por %p41, %p42
      %p45 = scmp.ne.s32.totalorder %s28, %s44
      %p46 = scmp.eq.s32.totalorder %s20, 0
      %p47 = por %p45, %p46
      %s49 = sadd.s32 %s48, 1
      %p52 = scmp.eq.s32.totalorder %s14, 1
      %p53 = scmp.ne.s32.totalorder %s48, %s50
      %p54 = scmp.eq.s32.totalorder %s14, 0
      %p55 = por %p53, %p54
      %p56 = scmp.ne.s32.totalorder %s48, %s50
      %p57 = scmp.eq.s32.totalorder %s19, 1
      %p58 = por %p56, %p57
      %p59 = scmp.ne.s32.totalorder %s50, %s51
      %p60 = scmp.eq.s32.totalorder %s19, 0
      %p61 = por %p59, %p60
      %p62 = scmp.ne.s32.totalorder %s50, %s51
      %p63 = scmp.eq.s32.totalorder %s20, 1
      %p64 = por %p62, %p63
      %p66 = scmp.ne.s32.totalorder %s51, %s65
      %p67 = scmp.eq.s32.totalorder %s20, 0
      %p68 = por %p66, %p67
      %s70 = sadd.s32 %s69, 1
      %p73 = scmp.eq.s32.totalorder %s14, 1
      %p74 = scmp.ne.s32.totalorder %s69, %s71
      %p75 = scmp.eq.s32.totalorder %s14, 0
      %p76 = por %p74, %p75
      %p77 = scmp.ne.s32.totalorder %s69, %s71
      %p78 = scmp.eq.s32.totalorder %s19, 1
      %p79 = por %p77, %p78
      %p80 = scmp.ne.s32.totalorder %s71, %s72
      %p81 = scmp.eq.s32.totalorder %s19, 0
      %p82 = por %p80, %p81
      %p83 = scmp.ne.s32.totalorder %s71, %s72
      %p84 = scmp.eq.s32.totalorder %s20, 1
      %p85 = por %p83, %p84
      %p87 = scmp.ne.s32.totalorder %s72, %s86
      %p88 = scmp.eq.s32.totalorder %s20, 0
      %p89 = por %p87, %p88
      %s91 = sadd.s32 %s90, 1
      %p94 = scmp.eq.s32.totalorder %s14, 1
      %p95 = scmp.ne.s32.totalorder %s90, %s92
      %p96 = scmp.eq.s32.totalorder %s14, 0
      %p97 = por %p95, %p96
      %p98 = scmp.ne.s32.totalorder %s90, %s92
      %p99 = scmp.eq.s32.totalorder %s19, 1
      %p100 = por %p98, %p99
      %p101 = scmp.ne.s32.totalorder %s92, %s93
      %p102 = scmp.eq.s32.totalorder %s19, 0
      %p103 = por %p101, %p102
      %p104 = scmp.ne.s32.totalorder %s92, %s93
      %p105 = scmp.eq.s32.totalorder %s20, 1
      %p106 = por %p104, %p105
      %p108 = scmp.ne.s32.totalorder %s93, %s107
      %p109 = scmp.eq.s32.totalorder %s20, 0
      %p110 = por %p108, %p109
      %s111 = ssub.s32 %s14, %s21
      %p112 = scmp.eq.s32.totalorder %s111, 0
      %s114 = sadd.s32 %s113, 1
      %s115 = scalar_select %p112, %s113, %s114
      %p118 = pneg %p112
      %p119 = scmp.eq.s32.totalorder %s14, 1
      %p120 = por %p118, %p119
      %p121 = scmp.ne.s32.totalorder %s113, %s116
      %p122 = scmp.eq.s32.totalorder %s14, 0
      %p123 = por %p121, %p122
      %p124 = scmp.ne.s32.totalorder %s113, %s116
      %p125 = scmp.eq.s32.totalorder %s19, 1
      %p126 = por %p124, %p125
      %p127 = scmp.ne.s32.totalorder %s116, %s117
      %p128 = scmp.eq.s32.totalorder %s19, 0
      %p129 = por %p127, %p128
      %p130 = scmp.ne.s32.totalorder %s116, %s117
      %p131 = scmp.eq.s32.totalorder %s20, 1
      %p132 = por %p130, %p131
      %p134 = scmp.ne.s32.totalorder %s117, %s133
      %p135 = scmp.eq.s32.totalorder %s20, 0
      %p136 = por %p134, %p135
      %p137 = scmp.le.s32.totalorder 1, %s14
      %p138 = scmp.lt.s32.totalorder %s14, 3
      %p139 = pnand %p137, %p138
      %p140 = pneg %p139
      // Predicated region
      $region9: #{tpu_custom_call.1} parent=5 // pred_check
        _
      $region10: #{tpu_custom_call.1} parent=5 // pred_check_branch
        %142 = sbr.rel (%p139) target = $region12
      $region11: #{tpu_custom_call.1} parent=5 // pred_region
        %s143 = ssub.s32 %s14, 1
        // Predicated region
        $region13: #{tpu_custom_call.1} parent=11 // pred_check
          %p144 = pneg %p61
        $region14: #{tpu_custom_call.1} parent=11 // pred_check_branch
          %146 = sbr.rel (%p144) target = $region16
        $region15: #{tpu_custom_call.1} parent=11 // pred_region
          _
        $region16: #{tpu_custom_call.1} parent=11 // pred_fallthru
          _
        // Predicated region
        $region17: #{tpu_custom_call.1} parent=11 // pred_check
          %p147 = pneg %p82
        $region18: #{tpu_custom_call.1} parent=11 // pred_check_branch
          %149 = sbr.rel (%p147) target = $region20
        $region19: #{tpu_custom_call.1} parent=11 // pred_region
          %s151 = ssub.s32 1024, 1024
          %152 = vsyncadd [#allocation3], %s151
          %s153 = sshll.u32 [#allocation2], 4
          %s154 = int_to_ptr.vmem [resolvable:$true] %s153
          %159 = dma.hbm_to_vmem [thread:$0]  %s2, 1024, %s154, [#allocation3], 128, 128, 8
        $region20: #{tpu_custom_call.1} parent=11 // pred_fallthru
          _
        // Predicated region
        $region21: #{tpu_custom_call.1} parent=11 // pred_check
          %p160 = pneg %p103
        $region22: #{tpu_custom_call.1} parent=11 // pred_check_branch
          %162 = sbr.rel (%p160) target = $region24
        $region23: #{tpu_custom_call.1} parent=11 // pred_region
          _
        $region24: #{tpu_custom_call.1} parent=11 // pred_fallthru
          _
      $region12: #{tpu_custom_call.1} parent=5 // pred_fallthru
        _
      %p163 = scmp.lt.s32.totalorder %s14, 2
      // Predicated region
      $region25: #{tpu_custom_call.1} parent=5 // pred_check
        %p164 = pneg %p163
      $region26: #{tpu_custom_call.1} parent=5 // pred_check_branch
        %166 = sbr.rel (%p164) target = $region28
      $region27: #{tpu_custom_call.1} parent=5 // pred_region
        // Predicated region
        $region29: #{tpu_custom_call.1} parent=27 // pred_check
          %p167 = pneg %p34
        $region30: #{tpu_custom_call.1} parent=27 // pred_check_branch
          %169 = sbr.rel (%p167) target = $region32
        $region31: #{tpu_custom_call.1} parent=27 // pred_region
          %s170 = smul.u32 14, %s14
          %p171 = scmp.lt.s32.totalorder %s170, 27
          %s172 = scalar_select %p171, %s170, 27
          %s173 = smul.addr %s172, 4
          %s174 = scalar_lea.vmem %s0, %s173
          %s175 = smul.u32 14, %s14
        $region32: #{tpu_custom_call.1} parent=27 // pred_fallthru
          _
      $region28: #{tpu_custom_call.1} parent=5 // pred_fallthru
        _
      %p176 = scmp.le.s32.totalorder 1, %s14
      %p177 = scmp.lt.s32.totalorder %s14, 3
      %p178 = pnand %p176, %p177
      %p179 = pneg %p178
      // Predicated region
      $region33: #{tpu_custom_call.1} parent=5 // pred_check
        _
      $region34: #{tpu_custom_call.1} parent=5 // pred_check_branch
        %181 = sbr.rel (%p178) target = $region36
      $region35: #{tpu_custom_call.1} parent=5 // pred_region
        %s182 = ssub.s32 %s14, 1
        // Predicated region
        $region37: #{tpu_custom_call.1} parent=35 // pred_check
          %p183 = pneg %p82
        $region38: #{tpu_custom_call.1} parent=35 // pred_check_branch
          %185 = sbr.rel (%p183) target = $region40
        $region39: #{tpu_custom_call.1} parent=35 // pred_region
          %186 = dma.done [#allocation3], 1024
        $region40: #{tpu_custom_call.1} parent=35 // pred_fallthru
          _
        %s187 = smul.u32 14, %s19
        %p188 = scmp.lt.s32.totalorder %s187, 27
        %s189 = scalar_select %p188, %s187, 27
        %s190 = smul.addr %s189, 4
        %s191 = scalar_lea.vmem %s0, %s190
        %p192 = pneg %p40
        %p193 = pneg %p37
        %p194 = pneg %p61
        %p195 = pneg %p58
        %p196 = pneg %p82
        %p197 = pneg %p79
        %p198 = pneg %p103
        %p199 = pneg %p100
        %p200 = pneg %p129
        %p201 = pneg %p126
        %s202 = sand.u32 %s116, 1
        %s203 = scalar_lea.sflag [#allocation4], %s202
        %s204 = sand.u32 %s116, 1
        %s205 = smul.addr %s204, 56
        %s206 = scalar_lea.vmem [#allocation5], %s205
        %s207 = smul.u32 14, %s19
        %p208 = scmp.lt.s32.totalorder %s207, 27
        %s209 = scalar_select %p208, %s207, 27
        %s210 = smul.addr %s209, 4
        %s211 = scalar_lea.vmem %s0, %s210
        %s212 = smul.u32 14, %s19
        %s213 = smul.u32 14, %s19
        %v215 = vld [vmem:[%s211] sm:$0xf]
        %v216 = vld [vmem:[%s211 + $0x4] sm:$0xf]
        %v217 = vld [vmem:[%s211 + $0x8] sm:$0xf]
        %v218 = vld [vmem:[%s211 + $0xc] sm:$0xf]
        %v219 = vld [vmem:[%s211 + $0x10] sm:$0xf]
        %v220 = vld [vmem:[%s211 + $0x14] sm:$0xf]
        %v221 = vld [vmem:[%s211 + $0x18] sm:$0xf]
        %v222 = vld [vmem:[%s211 + $0x1c] sm:$0xf]
        %v223 = vld [vmem:[%s211 + $0x20] sm:$0xf]
        %v224 = vld [vmem:[%s211 + $0x24] sm:$0xf]
        %v225 = vld [vmem:[%s211 + $0x28] sm:$0xf]
        %v226 = vld [vmem:[%s211 + $0x2c] sm:$0xf]
        %v227 = vld [vmem:[%s211 + $0x30] sm:$0xf]
        %v228 = vld [vmem:[%s211 + $0x34] sm:$0xf]
        %v229 = vld [vmem:[%s1] sm:$0xf]
        %v230 = vld [vmem:[%s1 + $0x4] sm:$0xf]
        %v231 = vld [vmem:[%s1 + $0x8] sm:$0xf]
        %v232 = vld [vmem:[%s1 + $0xc] sm:$0xf]
        %v233 = vld [vmem:[%s1 + $0x10] sm:$0xf]
        %v248 = vunpack.c.l.b16 %v215
        %v249 = vunpack.c.l.b16 %v216
        %v250 = vunpack.c.l.b16 %v217
        %v251 = vunpack.c.l.b16 %v218
        %v252 = vunpack.c.l.b16 %v219
        %v253 = vunpack.c.l.b16 %v220
        %v254 = vunpack.c.l.b16 %v221
        %v255 = vunpack.c.l.b16 %v222
        %v256 = vunpack.c.l.b16 %v223
        %v257 = vunpack.c.l.b16 %v224
        %v258 = vunpack.c.l.b16 %v225
        %v259 = vunpack.c.l.b16 %v226
        %v260 = vunpack.c.l.b16 %v227
        %v261 = vunpack.c.l.b16 %v228
        %v262 = vpack.c.b16 %v249, %v248
        %v263 = vpack.c.b16 %v251, %v250
        %v264 = vpack.c.b16 %v253, %v252
        %v265 = vpack.c.b16 %v255, %v254
        %v266 = vpack.c.b16 %v257, %v256
        %v267 = vpack.c.b16 %v259, %v258
        %v268 = vpack.c.b16 %v261, %v260
        %v274 = vunpack.c.l.b16 %v229
        %v275 = vunpack.c.l.b16 %v230
        %v276 = vunpack.c.l.b16 %v231
        %v277 = vunpack.c.l.b16 %v232
        %v278 = vunpack.c.l.b16 %v233
        %v279 = vpack.c.b16 %v275, %v274
        %v280 = vpack.c.b16 %v277, %v276
        %v281 = vpack.c.b16 %v278, %v278
        %vm284 = vcmask 326656
        %v286 = vsel %vm284, %v262, 0
        %v289 = vsel %vm284, %v263, 0
        %v292 = vsel %vm284, %v264, 0
        %v295 = vsel %vm284, %v265, 0
        %v298 = vsel %vm284, %v266, 0
        %v301 = vsel %vm284, %v267, 0
        %v304 = vsel %vm284, %v268, 0
        %vm306 = vcmask 1043456
        %v308 = vsel %vm306, %v281, 0
        %310 = vmatprep.subr.bf16.mxu0 0
        %311 = vmatpush1.bf16.msra.mxu0 0
        %312 = vmatprep.subr.bf16.mxu0 0
        %313 = vmatpush1.bf16.msra.mxu0 0
        %314 = vmatprep.subr.bf16.mxu0 0
        %315 = vmatpush1.bf16.msra.mxu0 0
        %316 = vmatprep.subr.bf16.mxu0 0
        %317 = vmatpush1.bf16.msra.mxu0 0
        %318 = vmatprep.subr.bf16.mxu0 0
        %319 = vmatpush1.bf16.msra.mxu0 0
        %320 = vmatprep.subr.bf16.mxu0 0
        %321 = vmatpush1.bf16.msra.mxu0 %v308
        %322 = vmatprep.subr.bf16.mxu0 0
        %323 = vmatpush1.bf16.msra.mxu0 %v280
        %324 = vmatprep.subr.bf16.mxu0 0
        %325 = vmatpush1.bf16.msra.mxu0 %v279
        %326 = vmatprep.subr.bf16.mxu0 0
        %327 = vmatpush2.bf16.msra.mxu0 0
        %328 = vmatprep.subr.bf16.mxu0 0
        %329 = vmatpush2.bf16.msra.mxu0 0
        %330 = vmatprep.subr.bf16.mxu0 0
        %331 = vmatpush2.bf16.msra.mxu0 0
        %332 = vmatprep.subr.bf16.mxu0 0
        %333 = vmatpush2.bf16.msra.mxu0 0
        %334 = vmatprep.subr.bf16.mxu0 0
        %335 = vmatpush2.bf16.msra.mxu0 0
        %336 = vmatprep.subr.bf16.mxu0 0
        %337 = vmatpush2.bf16.msra.mxu0 0
        %338 = vmatprep.subr.bf16.mxu0 0
        %339 = vmatpush2.bf16.msra.mxu0 0
        %340 = vmatprep.subr.bf16.mxu0 0
        %341 = vmatpush2.bf16.msra.mxu0 0
        %342 = vmatprep.mubr.bf16.mxu0 0
        %343 = vmatmul.mubr.bf16.gmra.mxu0 %v286
        %v344 = vpop.f32.mrf.mxu0
        %v345 = vadd.f32 0.0, %v344
        %v346 = vpop.f32.mrf.mxu0
        %v347 = vpop.f32.mrf.mxu0
        %v348 = vadd.f32 0.0, %v347
        %v349 = vpop.f32.mrf.mxu0
        %350 = vmatprep.mubr.bf16.mxu0 0
        %351 = vmatmul.mubr.bf16.gmra.mxu0 %v289
        %v352 = vpop.f32.mrf.mxu0
        %v353 = vadd.f32 0.0, %v352
        %v354 = vpop.f32.mrf.mxu0
        %v355 = vpop.f32.mrf.mxu0
        %v356 = vadd.f32 0.0, %v355
        %v357 = vpop.f32.mrf.mxu0
        %358 = vmatprep.mubr.bf16.mxu0 0
        %359 = vmatmul.mubr.bf16.gmra.mxu0 %v292
        %v360 = vpop.f32.mrf.mxu0
        %v361 = vadd.f32 0.0, %v360
        %v362 = vpop.f32.mrf.mxu0
        %v363 = vpop.f32.mrf.mxu0
        %v364 = vadd.f32 0.0, %v363
        %v365 = vpop.f32.mrf.mxu0
        %366 = vmatprep.mubr.bf16.mxu0 0
        %367 = vmatmul.mubr.bf16.gmra.mxu0 %v295
        %v368 = vpop.f32.mrf.mxu0
        %v369 = vadd.f32 0.0, %v368
        %v370 = vpop.f32.mrf.mxu0
        %v371 = vpop.f32.mrf.mxu0
        %v372 = vadd.f32 0.0, %v371
        %v373 = vpop.f32.mrf.mxu0
        %374 = vmatprep.mubr.bf16.mxu0 0
        %375 = vmatmul.mubr.bf16.gmra.mxu0 %v298
        %v376 = vpop.f32.mrf.mxu0
        %v377 = vadd.f32 0.0, %v376
        %v378 = vpop.f32.mrf.mxu0
        %v379 = vpop.f32.mrf.mxu0
        %v380 = vadd.f32 0.0, %v379
        %v381 = vpop.f32.mrf.mxu0
        %382 = vmatprep.mubr.bf16.mxu0 0
        %383 = vmatmul.mubr.bf16.gmra.mxu0 %v301
        %v384 = vpop.f32.mrf.mxu0
        %v385 = vadd.f32 0.0, %v384
        %v386 = vpop.f32.mrf.mxu0
        %v387 = vpop.f32.mrf.mxu0
        %v388 = vadd.f32 0.0, %v387
        %v389 = vpop.f32.mrf.mxu0
        %390 = vmatprep.mubr.bf16.mxu0 0
        %391 = vmatmul.mubr.bf16.gmra.mxu0 %v304
        %v392 = vpop.f32.mrf.mxu0
        %v393 = vadd.f32 0.0, %v392
        %v394 = vpop.f32.mrf.mxu0
        %v395 = vpop.f32.mrf.mxu0
        %v396 = vadd.f32 0.0, %v395
        %v397 = vpop.f32.mrf.mxu0
        %398 = vdwg.mxu0
        %v399 = vmax.f32 %v345, 0.0
        %v400 = vmax.f32 %v348, 0.0
        %v401 = vmax.f32 %v353, 0.0
        %v402 = vmax.f32 %v356, 0.0
        %v403 = vmax.f32 %v361, 0.0
        %v404 = vmax.f32 %v364, 0.0
        %v405 = vmax.f32 %v369, 0.0
        %v406 = vmax.f32 %v372, 0.0
        %v407 = vmax.f32 %v377, 0.0
        %v408 = vmax.f32 %v380, 0.0
        %v409 = vmax.f32 %v385, 0.0
        %v410 = vmax.f32 %v388, 0.0
        %v411 = vmax.f32 %v393, 0.0
        %v412 = vmax.f32 %v396, 0.0
        %v413 = vpack.c.bf16 %v400, %v399
        %v414 = vpack.c.bf16 %v402, %v401
        %v415 = vpack.c.bf16 %v404, %v403
        %v416 = vpack.c.bf16 %v406, %v405
        %v417 = vpack.c.bf16 %v408, %v407
        %v418 = vpack.c.bf16 %v410, %v409
        %v419 = vpack.c.bf16 %v412, %v411
        %v420 = vld [vmem:[#allocation2] sm:$0xff]
        %v421 = vld [vmem:[#allocation2 + $0x8] sm:$0xff]
        %v422 = vld [vmem:[#allocation2 + $0x10] sm:$0xff]
        %v423 = vld [vmem:[#allocation2 + $0x18] sm:$0xff]
        %v424 = vld [vmem:[#allocation2 + $0x20] sm:$0xff]
        %v425 = vld [vmem:[#allocation2 + $0x28] sm:$0xff]
        %v426 = vld [vmem:[#allocation2 + $0x30] sm:$0xff]
        %v427 = vld [vmem:[#allocation2 + $0x38] sm:$0xff]
        %v436 = vunpack.c.l.b16 %v420
        %v437 = vunpack.c.h.b16 %v420
        %v438 = vunpack.c.l.b16 %v421
        %v439 = vunpack.c.h.b16 %v421
        %v440 = vunpack.c.l.b16 %v422
        %v441 = vunpack.c.h.b16 %v422
        %v442 = vunpack.c.l.b16 %v423
        %v443 = vunpack.c.h.b16 %v423
        %v444 = vunpack.c.l.b16 %v424
        %v445 = vunpack.c.h.b16 %v424
        %v446 = vunpack.c.l.b16 %v425
        %v447 = vunpack.c.h.b16 %v425
        %v448 = vunpack.c.l.b16 %v426
        %v449 = vunpack.c.h.b16 %v426
        %v450 = vunpack.c.l.b16 %v427
        %v451 = vunpack.c.h.b16 %v427
        %v452 = vpack.c.b16 %v438, %v436
        %v453 = vpack.c.b16 %v439, %v437
        %v454 = vpack.c.b16 %v442, %v440
        %v455 = vpack.c.b16 %v443, %v441
        %v456 = vpack.c.b16 %v446, %v444
        %v457 = vpack.c.b16 %v447, %v445
        %v458 = vpack.c.b16 %v450, %v448
        %v459 = vpack.c.b16 %v451, %v449
        %vm468 = vcmask 523264
        %v470 = vsel %vm468, %v413, 0
        %v473 = vsel %vm468, %v414, 0
        %v476 = vsel %vm468, %v415, 0
        %v479 = vsel %vm468, %v416, 0
        %v482 = vsel %vm468, %v417, 0
        %v485 = vsel %vm468, %v418, 0
        %v488 = vsel %vm468, %v419, 0
        %490 = vmatprep.subr.bf16.mxu0 0
        %491 = vmatpush1.bf16.msra.mxu0 0
        %492 = vmatprep.subr.bf16.mxu0 0
        %493 = vmatpush1.bf16.msra.mxu0 0
        %494 = vmatprep.subr.bf16.mxu0 0
        %495 = vmatpush1.bf16.msra.mxu0 0
        %496 = vmatprep.subr.bf16.mxu0 0
        %497 = vmatpush1.bf16.msra.mxu0 0
        %498 = vmatprep.subr.bf16.mxu0 %v459
        %499 = vmatpush1.bf16.msra.mxu0 %v458
        %500 = vmatprep.subr.bf16.mxu0 %v457
        %501 = vmatpush1.bf16.msra.mxu0 %v456
        %502 = vmatprep.subr.bf16.mxu0 %v455
        %503 = vmatpush1.bf16.msra.mxu0 %v454
        %504 = vmatprep.subr.bf16.mxu0 %v453
        %505 = vmatpush1.bf16.msra.mxu0 %v452
        %506 = vmatprep.subr.bf16.mxu0 0
        %507 = vmatpush2.bf16.msra.mxu0 0
        %508 = vmatprep.subr.bf16.mxu0 0
        %509 = vmatpush2.bf16.msra.mxu0 0
        %510 = vmatprep.subr.bf16.mxu0 0
        %511 = vmatpush2.bf16.msra.mxu0 0
        %512 = vmatprep.subr.bf16.mxu0 0
        %513 = vmatpush2.bf16.msra.mxu0 0
        %514 = vmatprep.subr.bf16.mxu0 0
        %515 = vmatpush2.bf16.msra.mxu0 0
        %516 = vmatprep.subr.bf16.mxu0 0
        %517 = vmatpush2.bf16.msra.mxu0 0
        %518 = vmatprep.subr.bf16.mxu0 0
        %519 = vmatpush2.bf16.msra.mxu0 0
        %520 = vmatprep.subr.bf16.mxu0 0
        %521 = vmatpush2.bf16.msra.mxu0 0
        %522 = vmatprep.mubr.bf16.mxu0 0
        %523 = vmatmul.mubr.bf16.gmra.mxu0 %v470
        %v524 = vpop.f32.mrf.mxu0
        %v525 = vadd.f32 0.0, %v524
        %v526 = vpop.f32.mrf.mxu0
        %v527 = vadd.f32 0.0, %v526
        %v528 = vpop.f32.mrf.mxu0
        %v529 = vadd.f32 0.0, %v528
        %v530 = vpop.f32.mrf.mxu0
        %v531 = vadd.f32 0.0, %v530
        %532 = vmatprep.mubr.bf16.mxu0 0
        %533 = vmatmul.mubr.bf16.gmra.mxu0 %v473
        %v534 = vpop.f32.mrf.mxu0
        %v535 = vadd.f32 0.0, %v534
        %v536 = vpop.f32.mrf.mxu0
        %v537 = vadd.f32 0.0, %v536
        %v538 = vpop.f32.mrf.mxu0
        %v539 = vadd.f32 0.0, %v538
        %v540 = vpop.f32.mrf.mxu0
        %v541 = vadd.f32 0.0, %v540
        %542 = vmatprep.mubr.bf16.mxu0 0
        %543 = vmatmul.mubr.bf16.gmra.mxu0 %v476
        %v544 = vpop.f32.mrf.mxu0
        %v545 = vadd.f32 0.0, %v544
        %v546 = vpop.f32.mrf.mxu0
        %v547 = vadd.f32 0.0, %v546
        %v548 = vpop.f32.mrf.mxu0
        %v549 = vadd.f32 0.0, %v548
        %v550 = vpop.f32.mrf.mxu0
        %v551 = vadd.f32 0.0, %v550
        %552 = vmatprep.mubr.bf16.mxu0 0
        %553 = vmatmul.mubr.bf16.gmra.mxu0 %v479
        %v554 = vpop.f32.mrf.mxu0
        %v555 = vadd.f32 0.0, %v554
        %v556 = vpop.f32.mrf.mxu0
        %v557 = vadd.f32 0.0, %v556
        %v558 = vpop.f32.mrf.mxu0
        %v559 = vadd.f32 0.0, %v558
        %v560 = vpop.f32.mrf.mxu0
        %v561 = vadd.f32 0.0, %v560
        %562 = vmatprep.mubr.bf16.mxu0 0
        %563 = vmatmul.mubr.bf16.gmra.mxu0 %v482
        %v564 = vpop.f32.mrf.mxu0
        %v565 = vadd.f32 0.0, %v564
        %v566 = vpop.f32.mrf.mxu0
        %v567 = vadd.f32 0.0, %v566
        %v568 = vpop.f32.mrf.mxu0
        %v569 = vadd.f32 0.0, %v568
        %v570 = vpop.f32.mrf.mxu0
        %v571 = vadd.f32 0.0, %v570
        %572 = vmatprep.mubr.bf16.mxu0 0
        %573 = vmatmul.mubr.bf16.gmra.mxu0 %v485
        %v574 = vpop.f32.mrf.mxu0
        %v575 = vadd.f32 0.0, %v574
        %v576 = vpop.f32.mrf.mxu0
        %v577 = vadd.f32 0.0, %v576
        %v578 = vpop.f32.mrf.mxu0
        %v579 = vadd.f32 0.0, %v578
        %v580 = vpop.f32.mrf.mxu0
        %v581 = vadd.f32 0.0, %v580
        %582 = vmatprep.mubr.bf16.mxu0 0
        %583 = vmatmul.mubr.bf16.gmra.mxu0 %v488
        %v584 = vpop.f32.mrf.mxu0
        %v585 = vadd.f32 0.0, %v584
        %v586 = vpop.f32.mrf.mxu0
        %v587 = vadd.f32 0.0, %v586
        %v588 = vpop.f32.mrf.mxu0
        %v589 = vadd.f32 0.0, %v588
        %v590 = vpop.f32.mrf.mxu0
        %v591 = vadd.f32 0.0, %v590
        %592 = vdwg.mxu0
        %v593 = vmax.f32 %v525, 0.0
        %v594 = vmax.f32 %v527, 0.0
        %v595 = vmax.f32 %v529, 0.0
        %v596 = vmax.f32 %v531, 0.0
        %v597 = vmax.f32 %v535, 0.0
        %v598 = vmax.f32 %v537, 0.0
        %v599 = vmax.f32 %v539, 0.0
        %v600 = vmax.f32 %v541, 0.0
        %v601 = vmax.f32 %v545, 0.0
        %v602 = vmax.f32 %v547, 0.0
        %v603 = vmax.f32 %v549, 0.0
        %v604 = vmax.f32 %v551, 0.0
        %v605 = vmax.f32 %v555, 0.0
        %v606 = vmax.f32 %v557, 0.0
        %v607 = vmax.f32 %v559, 0.0
        %v608 = vmax.f32 %v561, 0.0
        %v609 = vmax.f32 %v565, 0.0
        %v610 = vmax.f32 %v567, 0.0
        %v611 = vmax.f32 %v569, 0.0
        %v612 = vmax.f32 %v571, 0.0
        %v613 = vmax.f32 %v575, 0.0
        %v614 = vmax.f32 %v577, 0.0
        %v615 = vmax.f32 %v579, 0.0
        %v616 = vmax.f32 %v581, 0.0
        %v617 = vmax.f32 %v585, 0.0
        %v618 = vmax.f32 %v587, 0.0
        %v619 = vmax.f32 %v589, 0.0
        %v620 = vmax.f32 %v591, 0.0
        %v621 = vpack.c.bf16 %v595, %v593
        %v622 = vpack.c.bf16 %v596, %v594
        %v623 = vpack.c.bf16 %v599, %v597
        %v624 = vpack.c.bf16 %v600, %v598
        %v625 = vpack.c.bf16 %v603, %v601
        %v626 = vpack.c.bf16 %v604, %v602
        %v627 = vpack.c.bf16 %v607, %v605
        %v628 = vpack.c.bf16 %v608, %v606
        %v629 = vpack.c.bf16 %v611, %v609
        %v630 = vpack.c.bf16 %v612, %v610
        %v631 = vpack.c.bf16 %v615, %v613
        %v632 = vpack.c.bf16 %v616, %v614
        %v633 = vpack.c.bf16 %v619, %v617
        %v634 = vpack.c.bf16 %v620, %v618
        %v635 = vld [vmem:[%s3] sm:$0xf]
        %v636 = vld [vmem:[%s3 + $0x4] sm:$0xf]
        %v637 = vld [vmem:[%s3 + $0x8] sm:$0xf]
        %v638 = vld [vmem:[%s3 + $0xc] sm:$0xf]
        %v639 = vld [vmem:[%s3 + $0x10] sm:$0xf]
        %v640 = vld [vmem:[%s3 + $0x14] sm:$0xf]
        %v641 = vld [vmem:[%s3 + $0x18] sm:$0xf]
        %v642 = vld [vmem:[%s3 + $0x1c] sm:$0xf]
        %v643 = vld [vmem:[%s3 + $0x20] sm:$0xf]
        %v644 = vld [vmem:[%s3 + $0x24] sm:$0xf]
        %v645 = vld [vmem:[%s3 + $0x28] sm:$0xf]
        %v646 = vld [vmem:[%s3 + $0x2c] sm:$0xf]
        %v647 = vld [vmem:[%s3 + $0x30] sm:$0xf]
        %v648 = vld [vmem:[%s3 + $0x34] sm:$0xf]
        %v649 = vld [vmem:[%s3 + $0x38] sm:$0xf]
        %v650 = vld [vmem:[%s3 + $0x3c] sm:$0xf]
        %v651 = vld [vmem:[%s3 + $0x40] sm:$0xf]
        %v652 = vld [vmem:[%s3 + $0x44] sm:$0xf]
        %v653 = vld [vmem:[%s3 + $0x48] sm:$0xf]
        %v654 = vld [vmem:[%s3 + $0x4c] sm:$0xf]
        %v655 = vld [vmem:[%s3 + $0x50] sm:$0xf]
        %v656 = vld [vmem:[%s3 + $0x54] sm:$0xf]
        %v657 = vld [vmem:[%s3 + $0x58] sm:$0xf]
        %v658 = vld [vmem:[%s3 + $0x5c] sm:$0xf]
        %v683 = vunpack.c.l.b16 %v635
        %v684 = vunpack.c.l.b16 %v636
        %v685 = vunpack.c.l.b16 %v637
        %v686 = vunpack.c.l.b16 %v638
        %v687 = vunpack.c.l.b16 %v639
        %v688 = vunpack.c.l.b16 %v640
        %v689 = vunpack.c.l.b16 %v641
        %v690 = vunpack.c.l.b16 %v642
        %v691 = vunpack.c.l.b16 %v643
        %v692 = vunpack.c.l.b16 %v644
        %v693 = vunpack.c.l.b16 %v645
        %v694 = vunpack.c.l.b16 %v646
        %v695 = vunpack.c.l.b16 %v647
        %v696 = vunpack.c.l.b16 %v648
        %v697 = vunpack.c.l.b16 %v649
        %v698 = vunpack.c.l.b16 %v650
        %v699 = vunpack.c.l.b16 %v651
        %v700 = vunpack.c.l.b16 %v652
        %v701 = vunpack.c.l.b16 %v653
        %v702 = vunpack.c.l.b16 %v654
        %v703 = vunpack.c.l.b16 %v655
        %v704 = vunpack.c.l.b16 %v656
        %v705 = vunpack.c.l.b16 %v657
        %v706 = vunpack.c.l.b16 %v658
        %v707 = vpack.c.b16 %v684, %v683
        %v708 = vpack.c.b16 %v686, %v685
        %v709 = vpack.c.b16 %v688, %v687
        %v710 = vpack.c.b16 %v690, %v689
        %v711 = vpack.c.b16 %v692, %v691
        %v712 = vpack.c.b16 %v694, %v693
        %v713 = vpack.c.b16 %v696, %v695
        %v714 = vpack.c.b16 %v698, %v697
        %v715 = vpack.c.b16 %v700, %v699
        %v716 = vpack.c.b16 %v702, %v701
        %v717 = vpack.c.b16 %v704, %v703
        %v718 = vpack.c.b16 %v706, %v705
        %v732 = vsel %vm468, %v622, 0
        %v735 = vsel %vm468, %v624, 0
        %v738 = vsel %vm468, %v626, 0
        %v741 = vsel %vm468, %v628, 0
        %v744 = vsel %vm468, %v630, 0
        %v747 = vsel %vm468, %v632, 0
        %v750 = vsel %vm468, %v634, 0
        %752 = vmatprep.subr.bf16.mxu0 0
        %753 = vmatpush1.bf16.msra.mxu0 %v714
        %754 = vmatprep.subr.bf16.mxu0 0
        %755 = vmatpush1.bf16.msra.mxu0 %v713
        %756 = vmatprep.subr.bf16.mxu0 0
        %757 = vmatpush1.bf16.msra.mxu0 %v712
        %758 = vmatprep.subr.bf16.mxu0 0
        %759 = vmatpush1.bf16.msra.mxu0 %v711
        %760 = vmatprep.subr.bf16.mxu0 0
        %761 = vmatpush1.bf16.msra.mxu0 %v710
        %762 = vmatprep.subr.bf16.mxu0 0
        %763 = vmatpush1.bf16.msra.mxu0 %v709
        %764 = vmatprep.subr.bf16.mxu0 0
        %765 = vmatpush1.bf16.msra.mxu0 %v708
        %766 = vmatprep.subr.bf16.mxu0 0
        %767 = vmatpush1.bf16.msra.mxu0 %v707
        %768 = vmatprep.subr.bf16.mxu0 0
        %769 = vmatpush2.bf16.msra.mxu0 0
        %770 = vmatprep.subr.bf16.mxu0 0
        %771 = vmatpush2.bf16.msra.mxu0 0
        %772 = vmatprep.subr.bf16.mxu0 0
        %773 = vmatpush2.bf16.msra.mxu0 0
        %774 = vmatprep.subr.bf16.mxu0 0
        %775 = vmatpush2.bf16.msra.mxu0 0
        %776 = vmatprep.subr.bf16.mxu0 0
        %777 = vmatpush2.bf16.msra.mxu0 %v718
        %778 = vmatprep.subr.bf16.mxu0 0
        %779 = vmatpush2.bf16.msra.mxu0 %v717
        %780 = vmatprep.subr.bf16.mxu0 0
        %781 = vmatpush2.bf16.msra.mxu0 %v716
        %782 = vmatprep.subr.bf16.mxu0 0
        %783 = vmatpush2.bf16.msra.mxu0 %v715
        %784 = vmatprep.mubr.bf16.mxu0 %v732
        %785 = vmatmul.mubr.bf16.gmra.mxu0 %v621
        %v786 = vpop.f32.mrf.mxu0
        %v787 = vadd.f32 0.0, %v786
        %v788 = vpop.f32.mrf.mxu0
        %v789 = vpop.f32.mrf.mxu0
        %v790 = vadd.f32 0.0, %v789
        %v791 = vpop.f32.mrf.mxu0
        %792 = vmatprep.mubr.bf16.mxu0 %v735
        %793 = vmatmul.mubr.bf16.gmra.mxu0 %v623
        %v794 = vpop.f32.mrf.mxu0
        %v795 = vadd.f32 0.0, %v794
        %v796 = vpop.f32.mrf.mxu0
        %v797 = vpop.f32.mrf.mxu0
        %v798 = vadd.f32 0.0, %v797
        %v799 = vpop.f32.mrf.mxu0
        %800 = vmatprep.mubr.bf16.mxu0 %v738
        %801 = vmatmul.mubr.bf16.gmra.mxu0 %v625
        %v802 = vpop.f32.mrf.mxu0
        %v803 = vadd.f32 0.0, %v802
        %v804 = vpop.f32.mrf.mxu0
        %v805 = vpop.f32.mrf.mxu0
        %v806 = vadd.f32 0.0, %v805
        %v807 = vpop.f32.mrf.mxu0
        %808 = vmatprep.mubr.bf16.mxu0 %v741
        %809 = vmatmul.mubr.bf16.gmra.mxu0 %v627
        %v810 = vpop.f32.mrf.mxu0
        %v811 = vadd.f32 0.0, %v810
        %v812 = vpop.f32.mrf.mxu0
        %v813 = vpop.f32.mrf.mxu0
        %v814 = vadd.f32 0.0, %v813
        %v815 = vpop.f32.mrf.mxu0
        %816 = vmatprep.mubr.bf16.mxu0 %v744
        %817 = vmatmul.mubr.bf16.gmra.mxu0 %v629
        %v818 = vpop.f32.mrf.mxu0
        %v819 = vadd.f32 0.0, %v818
        %v820 = vpop.f32.mrf.mxu0
        %v821 = vpop.f32.mrf.mxu0
        %v822 = vadd.f32 0.0, %v821
        %v823 = vpop.f32.mrf.mxu0
        %824 = vmatprep.mubr.bf16.mxu0 %v747
        %825 = vmatmul.mubr.bf16.gmra.mxu0 %v631
        %v826 = vpop.f32.mrf.mxu0
        %v827 = vadd.f32 0.0, %v826
        %v828 = vpop.f32.mrf.mxu0
        %v829 = vpop.f32.mrf.mxu0
        %v830 = vadd.f32 0.0, %v829
        %v831 = vpop.f32.mrf.mxu0
        %832 = vmatprep.mubr.bf16.mxu0 %v750
        %833 = vmatmul.mubr.bf16.gmra.mxu0 %v633
        %v834 = vpop.f32.mrf.mxu0
        %v835 = vadd.f32 0.0, %v834
        %v836 = vpop.f32.mrf.mxu0
        %v837 = vpop.f32.mrf.mxu0
        %v838 = vadd.f32 0.0, %v837
        %v839 = vpop.f32.mrf.mxu0
        %840 = vdwg.mxu0
        %v841 = vpack.c.bf16 %v790, %v787
        %v842 = vpack.c.bf16 %v798, %v795
        %v843 = vpack.c.bf16 %v806, %v803
        %v844 = vpack.c.bf16 %v814, %v811
        %v845 = vpack.c.bf16 %v822, %v819
        %v846 = vpack.c.bf16 %v830, %v827
        %v847 = vpack.c.bf16 %v838, %v835
        %v855 = vunpack.c.l.b16 %v841
        %v856 = vunpack.c.h.b16 %v841
        %v857 = vunpack.c.l.b16 %v842
        %v858 = vunpack.c.h.b16 %v842
        %v859 = vunpack.c.l.b16 %v843
        %v860 = vunpack.c.h.b16 %v843
        %v861 = vunpack.c.l.b16 %v844
        %v862 = vunpack.c.h.b16 %v844
        %v863 = vunpack.c.l.b16 %v845
        %v864 = vunpack.c.h.b16 %v845
        %v865 = vunpack.c.l.b16 %v846
        %v866 = vunpack.c.h.b16 %v846
        %v867 = vunpack.c.l.b16 %v847
        %v868 = vunpack.c.h.b16 %v847
        %v869 = vpack.c.b16 %v855, %v855
        %v870 = vpack.c.b16 %v856, %v856
        %v871 = vpack.c.b16 %v857, %v857
        %v872 = vpack.c.b16 %v858, %v858
        %v873 = vpack.c.b16 %v859, %v859
        %v874 = vpack.c.b16 %v860, %v860
        %v875 = vpack.c.b16 %v861, %v861
        %v876 = vpack.c.b16 %v862, %v862
        %v877 = vpack.c.b16 %v863, %v863
        %v878 = vpack.c.b16 %v864, %v864
        %v879 = vpack.c.b16 %v865, %v865
        %v880 = vpack.c.b16 %v866, %v866
        %v881 = vpack.c.b16 %v867, %v867
        %v882 = vpack.c.b16 %v868, %v868
        %897 = vst [vmem:[%s206] sm:$0xf] %v869
        %898 = vst [vmem:[%s206 + $0x4] sm:$0xf] %v870
        %899 = vst [vmem:[%s206 + $0x8] sm:$0xf] %v871
        %900 = vst [vmem:[%s206 + $0xc] sm:$0xf] %v872
        %901 = vst [vmem:[%s206 + $0x10] sm:$0xf] %v873
        %902 = vst [vmem:[%s206 + $0x14] sm:$0xf] %v874
        %903 = vst [vmem:[%s206 + $0x18] sm:$0xf] %v875
        %904 = vst [vmem:[%s206 + $0x1c] sm:$0xf] %v876
        %905 = vst [vmem:[%s206 + $0x20] sm:$0xf] %v877
        %906 = vst [vmem:[%s206 + $0x24] sm:$0xf] %v878
        %907 = vst [vmem:[%s206 + $0x28] sm:$0xf] %v879
        %908 = vst [vmem:[%s206 + $0x2c] sm:$0xf] %v880
        %909 = vst [vmem:[%s206 + $0x30] sm:$0xf] %v881
        %910 = vst [vmem:[%s206 + $0x34] sm:$0xf] %v882
        %s911 = sand.u32 %s116, 1
        %s912 = scalar_lea.sflag [#allocation4], %s911
        %s913 = sand.u32 %s116, 1
        %s914 = smul.addr %s913, 56
        %s915 = scalar_lea.vmem [#allocation5], %s914
        // Predicated region
        $region41: #{tpu_custom_call.1} parent=35 // pred_check
          %p916 = pneg %p126
        $region42: #{tpu_custom_call.1} parent=35 // pred_check_branch
          %918 = sbr.rel (%p916) target = $region44
        $region43: #{tpu_custom_call.1} parent=35 // pred_region
          %s919 = smul.u32 14, %s19
          %s921 = ssub.s32 896, 896
          %922 = vsyncadd %s912, %s921
          %s923 = smul.addr %s919, 64
          %s924 = scalar_lea.hbm %s4, %s923
          %s925 = sshll.u32 %s915, 4
          %s926 = int_to_ptr.vmem [resolvable:$true] %s925
          %931 = dma.vmem_to_hbm [thread:$0]  %s926, 896, %s924, %s912, 64, 64, 4
        $region44: #{tpu_custom_call.1} parent=35 // pred_fallthru
          _
      $region36: #{tpu_custom_call.1} parent=5 // pred_fallthru
        _
      %p932 = scmp.le.s32.totalorder 2, %s14
      // Predicated region
      $region45: #{tpu_custom_call.1} parent=5 // pred_check
        %p933 = pneg %p932
      $region46: #{tpu_custom_call.1} parent=5 // pred_check_branch
        %935 = sbr.rel (%p933) target = $region48
      $region47: #{tpu_custom_call.1} parent=5 // pred_region
        %s936 = ssub.s32 %s14, 2
        // Predicated region
        $region49: #{tpu_custom_call.1} parent=47 // pred_check
          %p937 = pneg %p132
        $region50: #{tpu_custom_call.1} parent=47 // pred_check_branch
          %939 = sbr.rel (%p937) target = $region52
        $region51: #{tpu_custom_call.1} parent=47 // pred_region
          %s940 = sand.u32 %s117, 1
          %s941 = scalar_lea.sflag [#allocation4], %s940
          %s942 = sand.u32 %s117, 1
          %s943 = smul.addr %s942, 56
          %s944 = scalar_lea.vmem [#allocation5], %s943
          %945 = dma.done %s941, 896
        $region52: #{tpu_custom_call.1} parent=47 // pred_fallthru
          _
      $region48: #{tpu_custom_call.1} parent=5 // pred_fallthru
        _
    $region6: #{tpu_custom_call.1} parent=1 // loop_footer
      %s18 = sadd.s32 1, %s14
    $region7: #{tpu_custom_call.1} parent=1 // loop_footer_branch
      %13 = sbr.rel target = $region3
    $region8: #{tpu_custom_call.1} parent=1 // loop_exit
      _
    %946 = vsyncpa [#allocation3], 1
    %s947 = scalar_lea.sflag [#allocation3], 1
    %948 = vsyncpa %s947, 1
    %949 = vsyncpa [#allocation4], 1
    %s950 = scalar_lea.sflag [#allocation4], 1
    %951 = vsyncpa %s950, 1

</llo_original>
